<compile_context>
chip_gen: v6e
topology: v6e:2x2x1
jax: 0.10.0
libtpu: 0.0.40
codegen_flags: <defaults>
</compile_context>

<pallas_src>
import numpy as np
import jax
import jax.numpy as jnp
from jax import lax
from jax.experimental import pallas as pl
from jax.experimental.pallas import tpu as pltpu

POOL = 6  # MaxPool2d(kernel_size=6, stride=6), floor mode


def _image_transform_kernel(x_ref, cmask_ref, rmask_ref, rsel_ref, o_ref):
    """One packed block: x_ref (TBs*H, TBl*W) -> o_ref (TBs*hp, TBl*W)."""
    x = x_ref[...].astype(jnp.float32)
    Hs, Ws = x.shape

    # Boundary masks hoisted ONCE (JAX does not CSE broadcast_in_dim, so each
    # implicit broadcast inside a multiply would be re-emitted).  crm combines
    # the right+bottom boundary so the diagonal tap costs a single multiply.
    cm = jnp.broadcast_to(cmask_ref[...], (Hs, Ws))   # 0.0 at each image's last column
    rm = jnp.broadcast_to(rmask_ref[...], (Hs, Ws))   # 0.0 at each image's last row
    crm = cm * rm

    relu = lambda v: jnp.maximum(v, 0.0)
    rgt = lambda v: pltpu.roll(v, shift=Ws - 1, axis=1)   # v[i, j+1] (wrapped)
    dwn = lambda v: pltpu.roll(v, shift=Hs - 1, axis=0)   # v[i+1, j] (wrapped)

    # PyTorch Conv2d(padding='same') with even kernels pads right/bottom, so the
    # (i, j+1) / (i+1, j) taps are zero past each image's last column/row.
    x1 = relu(rgt(x) * cm - x)                  # conv kernel [[-1, 1]]
    x2 = relu(dwn(x1) * rm - x1)                # conv kernel [[-1], [1]]
    x3 = relu(rgt(x2) * cm - dwn(x2) * rm)      # conv kernel [[0, 1], [-1, 0]]
    x4 = relu(x3 - dwn(rgt(x3)) * crm)          # conv kernel [[1, 0], [0, -1]]

    # 6-wide running max along one axis via 3 cascaded rolls (window 2 -> 4 -> 6).
    def wmax6(v, axis):
        n = v.shape[axis]
        a = jnp.maximum(v, pltpu.roll(v, shift=n - 1, axis=axis))
        b = jnp.maximum(a, pltpu.roll(a, shift=n - 2, axis=axis))
        return jnp.maximum(b, pltpu.roll(b, shift=n - 2, axis=axis))

    # Pool over rows (sublanes) on the full block, then immediately pick the
    # stride-6 window-start rows with a 0/1 selection matmul on the otherwise
    # idle MXU.  Interleaving the row selection between the two pooling passes
    # makes the lane-pooling below run on an array H/hp (~6-8x) smaller.
    # HIGHEST keeps the picked values exactly f32; the selection matrix is tiny
    # so the extra limb-split cost is only on the data operand.
    m0 = wmax6(x4, 0)                                        # (Hs, Ws)
    rows = jnp.dot(rsel_ref[...], m0,
                   preferred_element_type=jnp.float32,
                   precision=lax.Precision.HIGHEST)          # (Hr, Ws)

    # Pool over columns (lanes) on the reduced array and store the full
    # lane-dense (Hr, Ws) slab; the stride-6 column pick is a tiny host-side
    # gather (avoids a large per-step constant matmul and masked partial stores).
    o_ref[...] = wmax6(rows, 1)                              # (Hr, Ws)


def _choose_packing(B, H, W):
    """Pack TBl images along lanes (block width <= 1024) and TBs along sublanes
    (block height <= 512): <= 2 MiB f32 input block, comfortably inside a
    40 MiB VMEM budget even on v7x (64 MiB physical)."""
    TBl = 1
    if W < 128:  # images narrower than a vreg: lane-pack (needs a host transpose)
        while TBl * 2 <= B and TBl * 2 * W <= 1024:
            TBl *= 2
    per_col = -(-B // TBl)
    TBs = 1
    while TBs * 2 <= per_col and TBs * 2 * H <= 512:
        TBs *= 2
    # Prefer >= 2 grid blocks so a 2-TensorCore chip (v7x) can split the
    # "parallel" batch axis across cores, as long as blocks stay lane-dense.
    if -(-B // (TBs * TBl)) == 1 and TBs * TBl > 1:
        if TBs > 1:
            TBs //= 2
        elif TBl * W >= 256:
            TBl //= 2
    return TBs, TBl


def _packing_constants(H, W, hp, TBs, TBl):
    """Boundary masks + 0/1 row-selection matrix for the packed layout."""
    Hs, Ws = TBs * H, TBl * W
    col = np.arange(Ws)
    row = np.arange(Hs)
    cmask = ((col % W) != (W - 1)).astype(np.float32).reshape(1, Ws)
    rmask = ((row % H) != (H - 1)).astype(np.float32).reshape(Hs, 1)
    a = np.arange(TBs * hp)
    rsel = np.zeros((TBs * hp, Hs), np.float32)
    rsel[a, (a // hp) * H + (a % hp) * POOL] = 1.0
    return jnp.asarray(cmask), jnp.asarray(rmask), jnp.asarray(rsel)


@jax.jit
def image_transformer_numeric(x_nchw):
    """Numeric part of Image_Transformer.forward: conv_block + pool_block + flatten."""
    B, C, H, W = x_nchw.shape
    assert C == 1, "Image_Transformer works on single-channel images"
    assert H >= POOL and W >= POOL
    hp, wp = H // POOL, W // POOL

    # TODO(synk): very large single images (one image >~ a few MiB) would need
    # row-strip tiling with a 3-row halo instead of a full-image block.
    TBs, TBl = _choose_packing(B, H, W)
    per_blk = TBs * TBl
    nb = -(-B // per_blk)
    Bp = nb * per_blk
    Hs, Ws = TBs * H, TBl * W
    Hr = TBs * hp

    # NCHW -> (B, H, W).  No host-side dtype cast: the kernel casts to f32.
    x = x_nchw.reshape(B, H, W)
    if Bp != B:
        x = jnp.concatenate([x, jnp.zeros((Bp - B, H, W), x.dtype)], axis=0)

    if TBl == 1:
        # Images already lane-dense (W >= 128): sublane-only packing is a pure
        # reshape -- no HBM transpose round-trip before the kernel.
        x_packed = x.reshape(nb, Hs, Ws)
    else:
        # Lane-pack TBl images side by side.  This transpose is one extra HBM
        # round-trip over the input; jit keeps it a single fused copy.
        # TODO(synk): for large batches, have the upstream producer emit x
        # already in packed layout to remove this copy entirely.
        x_packed = (x.reshape(nb, TBs, TBl, H, W)
                     .transpose(0, 1, 3, 2, 4)
                     .reshape(nb, Hs, Ws))

    cmask, rmask, rsel = _packing_constants(H, W, hp, TBs, TBl)

    pooled_rows = pl.pallas_call(
        _image_transform_kernel,
        out_shape=jax.ShapeDtypeStruct((nb, Hr, Ws), jnp.float32),
        grid=(nb,),
        in_specs=[
            pl.BlockSpec((None, Hs, Ws), lambda b: (b, 0, 0)),
            # constant block index -> fetched once, resident across all steps
            pl.BlockSpec((1, Ws), lambda b: (0, 0)),
            pl.BlockSpec((Hs, 1), lambda b: (0, 0)),
            pl.BlockSpec((Hr, Hs), lambda b: (0, 0)),
        ],
        out_specs=pl.BlockSpec((None, Hr, Ws), lambda b: (b, 0, 0)),
        compiler_params=pltpu.CompilerParams(
            dimension_semantics=("parallel",),        # independent blocks (megacore)
            vmem_limit_bytes=40 * 1024 * 1024),       # headroom on v7x's 64 MiB VMEM
    )(x_packed, cmask, rmask, rsel)

    # Stride-6 pooled columns sit at l*W + 6*oj inside lane group l; gather them
    # host-side (tiny array) and unpack to (B, hp*wp).
    col_idx = (np.arange(TBl)[:, None] * W + np.arange(wp)[None, :] * POOL).reshape(-1)
    pooled = jnp.take(pooled_rows, jnp.asarray(col_idx), axis=2)   # (nb, Hr, TBl*wp)
    pooled = (pooled.reshape(nb, TBs, hp, TBl, wp)
                    .transpose(0, 1, 3, 2, 4)
                    .reshape(Bp, hp * wp))
    return pooled[:B]


class _Config1DImageReal:
    # TODO(synk): config1DImageReal is an external/undefined config in the source
    # module; deterministic stand-in special tokens are used here.
    bos = "<bos>"
    tmp = "<tmp>"
    sep = "<sep>"


def image_transformer_forward(x_nchw):
    """Full forward: numeric Pallas kernel + host-side token-string formatting."""
    flat = np.asarray(jax.block_until_ready(image_transformer_numeric(x_nchw)))
    prefix = [_Config1DImageReal.bos, _Config1DImageReal.tmp, _Config1DImageReal.sep]
    out = []
    for row in flat.tolist():
        out.append(prefix + [str(int(t)) for t in row])
    return out


def _reference_numeric(x_nchw):
    """Pure-JAX (XLA) reference: PyTorch Conv2d('same') + ReLU chain + MaxPool2d(6,6)."""
    kernels = [
        np.array([[-1.0, 1.0]], np.float32).reshape(1, 1, 1, 2),
        np.array([[-1.0], [1.0]], np.float32).reshape(1, 1, 2, 1),
        np.array([[0.0, 1.0], [-1.0, 0.0]], np.float32).reshape(1, 1, 2, 2),
        np.array([[1.0, 0.0], [0.0, -1.0]], np.float32).reshape(1, 1, 2, 2),
    ]
    y = x_nchw.astype(jnp.float32)
    for k in kernels:
        kh, kw = k.shape[-2:]
        y = lax.conv_general_dilated(
            y, jnp.asarray(k), window_strides=(1, 1),
            padding=((0, kh - 1), (0, kw - 1)),   # 'same' for even kernels -> right/bottom
            dimension_numbers=("NCHW", "OIHW", "NCHW"),
            precision=lax.Precision.HIGHEST)
        y = jnp.maximum(y, 0.0)
    pooled = lax.reduce_window(
        y, -jnp.inf, lax.max,
        window_dimensions=(1, 1, POOL, POOL),
        window_strides=(1, 1, POOL, POOL),
        padding="VALID")
    return pooled.reshape(x_nchw.shape[0], -1)


if __name__ == "__main__":
    key = jax.random.PRNGKey(0)
    # (8,1,16,16):  lane-packs 8 images -> 128-wide block, single grid step.
    # (3,1,16,16):  batch padding + 2-block grid (megacore-balance path).
    # (2,1,16,128): lane-dense images -> TBl=1 pure-reshape (no transpose) path.
    for B, H, W in [(8, 16, 16), (3, 16, 16), (2, 16, 128)]:
        key, sub = jax.random.split(key)
        x = jax.random.normal(sub, (B, 1, H, W), dtype=jnp.float32) * 5.0
        got = jax.block_until_ready(image_transformer_numeric(x))
        ref = jax.block_until_ready(_reference_numeric(x))
        np.testing.assert_allclose(np.asarray(got), np.asarray(ref),
                                   rtol=1e-5, atol=1e-5)

    x = jax.random.normal(jax.random.PRNGKey(0), (2, 1, 16, 16), jnp.float32) * 5.0
    tokens = image_transformer_forward(x)
    assert len(tokens) == 2
    assert all(len(row) == 3 + (16 // POOL) * (16 // POOL) for row in tokens)

    print("KERNEL_OK")
</pallas_src>

<mosaic_0001>
module attributes {stable_mosaic.version = 11 : i64} {
  func.func @_image_transform_kernel(%arg0: i32, %arg1: memref<1x16x128xf32, #tpu.memory_space<vmem>>, %arg2: memref<1x128xf32, #tpu.memory_space<vmem>>, %arg3: memref<16x1xf32, #tpu.memory_space<vmem>>, %arg4: memref<2x16xf32, #tpu.memory_space<vmem>>, %arg5: memref<1x2x128xf32, #tpu.memory_space<vmem>>) attributes {dimension_semantics = [#tpu.dimension_semantics<parallel>], iteration_bounds = array<i64: 1>, scalar_prefetch = 0 : i64, scratch_operands = 0 : i64, tpu.core_type = #tpu.core_type<tc>, window_params = [{transform_indices = @transform_0, window_bounds = array<i64: 1, 16, 128>}, {pipeline_mode = #tpu.pipeline_mode<synchronous>, transform_indices = @transform_1, window_bounds = array<i64: 1, 128>}, {pipeline_mode = #tpu.pipeline_mode<synchronous>, transform_indices = @transform_2, window_bounds = array<i64: 16, 1>}, {pipeline_mode = #tpu.pipeline_mode<synchronous>, transform_indices = @transform_3, window_bounds = array<i64: 2, 16>}, {transform_indices = @transform_4, window_bounds = array<i64: 1, 2, 128>}]} {
    %c0 = arith.constant 0 : index
    %c0_0 = arith.constant 0 : index
    %c0_1 = arith.constant 0 : index
    %0 = vector.load %arg1[%c0, %c0_0, %c0_1] : memref<1x16x128xf32, #tpu.memory_space<vmem>>, vector<1x16x128xf32>
    %1 = vector.shape_cast %0 : vector<1x16x128xf32> to vector<16x128xf32>
    %c0_2 = arith.constant 0 : index
    %c0_3 = arith.constant 0 : index
    %2 = vector.load %arg2[%c0_2, %c0_3] : memref<1x128xf32, #tpu.memory_space<vmem>>, vector<1x128xf32>
    %3 = vector.shape_cast %2 : vector<1x128xf32> to vector<1x128xf32>
    %4 = vector.broadcast %3 : vector<1x128xf32> to vector<16x128xf32>
    %c0_4 = arith.constant 0 : index
    %c0_5 = arith.constant 0 : index
    %5 = vector.load %arg3[%c0_4, %c0_5] : memref<16x1xf32, #tpu.memory_space<vmem>>, vector<16x1xf32>
    %6 = vector.shape_cast %5 : vector<16x1xf32> to vector<16x1xf32>
    %7 = vector.broadcast %6 : vector<16x1xf32> to vector<16x128xf32>
    %8 = arith.mulf %4, %7 : vector<16x128xf32>
    %c127_i32 = arith.constant 127 : i32
    %9 = tpu.dynamic_rotate %1 by %c127_i32 dim 1 : vector<16x128xf32>, i32 -> vector<16x128xf32>
    %10 = arith.mulf %9, %4 : vector<16x128xf32>
    %11 = arith.subf %10, %1 : vector<16x128xf32>
    %cst = arith.constant 0.000000e+00 : f32
    %12 = vector.broadcast %cst : f32 to vector<16x128xf32>
    %13 = arith.maximumf %11, %12 : vector<16x128xf32>
    %c15_i32 = arith.constant 15 : i32
    %14 = tpu.dynamic_rotate %13 by %c15_i32 dim 0 : vector<16x128xf32>, i32 -> vector<16x128xf32>
    %15 = arith.mulf %14, %7 : vector<16x128xf32>
    %16 = arith.subf %15, %13 : vector<16x128xf32>
    %cst_6 = arith.constant 0.000000e+00 : f32
    %17 = vector.broadcast %cst_6 : f32 to vector<16x128xf32>
    %18 = arith.maximumf %16, %17 : vector<16x128xf32>
    %c127_i32_7 = arith.constant 127 : i32
    %19 = tpu.dynamic_rotate %18 by %c127_i32_7 dim 1 : vector<16x128xf32>, i32 -> vector<16x128xf32>
    %20 = arith.mulf %19, %4 : vector<16x128xf32>
    %c15_i32_8 = arith.constant 15 : i32
    %21 = tpu.dynamic_rotate %18 by %c15_i32_8 dim 0 : vector<16x128xf32>, i32 -> vector<16x128xf32>
    %22 = arith.mulf %21, %7 : vector<16x128xf32>
    %23 = arith.subf %20, %22 : vector<16x128xf32>
    %cst_9 = arith.constant 0.000000e+00 : f32
    %24 = vector.broadcast %cst_9 : f32 to vector<16x128xf32>
    %25 = arith.maximumf %23, %24 : vector<16x128xf32>
    %c127_i32_10 = arith.constant 127 : i32
    %26 = tpu.dynamic_rotate %25 by %c127_i32_10 dim 1 : vector<16x128xf32>, i32 -> vector<16x128xf32>
    %c15_i32_11 = arith.constant 15 : i32
    %27 = tpu.dynamic_rotate %26 by %c15_i32_11 dim 0 : vector<16x128xf32>, i32 -> vector<16x128xf32>
    %28 = arith.mulf %27, %8 : vector<16x128xf32>
    %29 = arith.subf %25, %28 : vector<16x128xf32>
    %cst_12 = arith.constant 0.000000e+00 : f32
    %30 = vector.broadcast %cst_12 : f32 to vector<16x128xf32>
    %31 = arith.maximumf %29, %30 : vector<16x128xf32>
    %c15_i32_13 = arith.constant 15 : i32
    %32 = tpu.dynamic_rotate %31 by %c15_i32_13 dim 0 : vector<16x128xf32>, i32 -> vector<16x128xf32>
    %33 = arith.maximumf %31, %32 : vector<16x128xf32>
    %c14_i32 = arith.constant 14 : i32
    %34 = tpu.dynamic_rotate %33 by %c14_i32 dim 0 : vector<16x128xf32>, i32 -> vector<16x128xf32>
    %35 = arith.maximumf %33, %34 : vector<16x128xf32>
    %c14_i32_14 = arith.constant 14 : i32
    %36 = tpu.dynamic_rotate %35 by %c14_i32_14 dim 0 : vector<16x128xf32>, i32 -> vector<16x128xf32>
    %37 = arith.maximumf %35, %36 : vector<16x128xf32>
    %c0_15 = arith.constant 0 : index
    %c0_16 = arith.constant 0 : index
    %38 = vector.load %arg4[%c0_15, %c0_16] : memref<2x16xf32, #tpu.memory_space<vmem>>, vector<2x16xf32>
    %cst_17 = arith.constant dense<0.000000e+00> : vector<2x128xf32>
    %39 = tpu.matmul %38, %37, %cst_17 {dimension_numbers = #tpu.dot_dimension_numbers<[1], [0], [0], [1], [0, 0, 1, 1], [], []>, precision = #tpu.contract_precision<fp32>} : vector<2x16xf32>, vector<16x128xf32>, vector<2x128xf32> -> vector<2x128xf32>
    %c127_i32_18 = arith.constant 127 : i32
    %40 = tpu.dynamic_rotate %39 by %c127_i32_18 dim 1 : vector<2x128xf32>, i32 -> vector<2x128xf32>
    %41 = arith.maximumf %39, %40 : vector<2x128xf32>
    %c126_i32 = arith.constant 126 : i32
    %42 = tpu.dynamic_rotate %41 by %c126_i32 dim 1 : vector<2x128xf32>, i32 -> vector<2x128xf32>
    %43 = arith.maximumf %41, %42 : vector<2x128xf32>
    %c126_i32_19 = arith.constant 126 : i32
    %44 = tpu.dynamic_rotate %43 by %c126_i32_19 dim 1 : vector<2x128xf32>, i32 -> vector<2x128xf32>
    %45 = arith.maximumf %43, %44 : vector<2x128xf32>
    %c0_20 = arith.constant 0 : index
    %c0_21 = arith.constant 0 : index
    %c0_22 = arith.constant 0 : index
    %46 = vector.load %arg5[%c0_20, %c0_21, %c0_22] : memref<1x2x128xf32, #tpu.memory_space<vmem>>, vector<1x2x128xf32>
    %47 = vector.shape_cast %46 : vector<1x2x128xf32> to vector<2x128xf32>
    %48 = vector.shape_cast %45 : vector<2x128xf32> to vector<1x2x128xf32>
    tpu.vector_store %arg5[%c0_20, %c0_21, %c0_22], %48 {strides = array<i32>} : memref<1x2x128xf32, #tpu.memory_space<vmem>>, vector<1x2x128xf32>,
    return
  }
  func.func @transform_0(%arg0: i32) -> (i32, i32, i32) {
    %c0_i32 = arith.constant 0 : i32
    %c0_i32_0 = arith.constant 0 : i32
    %c0_i32_1 = arith.constant 0 : i32
    return %arg0, %c0_i32, %c0_i32_0 : i32, i32, i32
  }
  func.func @transform_1(%arg0: i32) -> (i32, i32) {
    %c0_i32 = arith.constant 0 : i32
    %c0_i32_0 = arith.constant 0 : i32
    %c0_i32_1 = arith.constant 0 : i32
    return %c0_i32, %c0_i32_0 : i32, i32
  }
  func.func @transform_2(%arg0: i32) -> (i32, i32) {
    %c0_i32 = arith.constant 0 : i32
    %c0_i32_0 = arith.constant 0 : i32
    %c0_i32_1 = arith.constant 0 : i32
    return %c0_i32, %c0_i32_0 : i32, i32
  }
  func.func @transform_3(%arg0: i32) -> (i32, i32) {
    %c0_i32 = arith.constant 0 : i32
    %c0_i32_0 = arith.constant 0 : i32
    %c0_i32_1 = arith.constant 0 : i32
    return %c0_i32, %c0_i32_0 : i32, i32
  }
  func.func @transform_4(%arg0: i32) -> (i32, i32, i32) {
    %c0_i32 = arith.constant 0 : i32
    %c0_i32_0 = arith.constant 0 : i32
    %c0_i32_1 = arith.constant 0 : i32
    return %arg0, %c0_i32, %c0_i32_0 : i32, i32, i32
  }
}

</mosaic_0001>

<llo_original>
// kernel: image_transformer_numeric.1
$region0: #{image_transformer_numeric.1}
  #allocation0 [shape = 'u32[]', space=smem, size = 0x4, offset = 0x4, fixed_abs, tag = 'smem constant byte address 0x4 - core index']
  #allocation1 [shape = 'u32[144,128]{1,0:T(1,128)}', space=vmem, size = 0x12000, scoped, tag = 'internal scratch']
  %s0 = inlined_call_operand.vmem [shape: f32[1,16,128], index: 0, kind: input, shape index: {}]
  %s1 = inlined_call_operand.vmem [shape: f32[1,128], index: 1, kind: input, shape index: {}]
  %s2 = inlined_call_operand.vmem [shape: f32[16,1], index: 2, kind: input, shape index: {}]
  %s3 = inlined_call_operand.vmem [shape: f32[2,16], index: 3, kind: input, shape index: {}]
  %s4 = inlined_call_operand.vmem [shape: f32[1,2,128], index: 4, kind: output, shape index: {}]
  %s5 = sld [smem:[#allocation0]]
  $region26: #{image_transformer_numeric.1} parent=0
    _
  %s7 = ssub.s32 1, %s5
  %s8 = scalar_select 0, %s7, %s5
  // Predicated region
  $region2: #{image_transformer_numeric.1} parent=0 // pred_check
    _
  $region3: #{image_transformer_numeric.1} parent=0 // pred_check_branch
    %10 = sbr.rel (0) target = $region5
  $region4: #{image_transformer_numeric.1} parent=0 // pred_region
    _
  $region5: #{image_transformer_numeric.1} parent=0 // pred_fallthru
    _
  // Predicated region
  $region6: #{image_transformer_numeric.1} parent=0 // pred_check
    _
  $region7: #{image_transformer_numeric.1} parent=0 // pred_check_branch
    %12 = sbr.rel (0) target = $region9
  $region8: #{image_transformer_numeric.1} parent=0 // pred_region
    _
  $region9: #{image_transformer_numeric.1} parent=0 // pred_fallthru
    _
  // Predicated region
  $region10: #{image_transformer_numeric.1} parent=0 // pred_check
    _
  $region11: #{image_transformer_numeric.1} parent=0 // pred_check_branch
    %14 = sbr.rel (0) target = $region13
  $region12: #{image_transformer_numeric.1} parent=0 // pred_region
    _
  $region13: #{image_transformer_numeric.1} parent=0 // pred_fallthru
    _
  // Predicated region
  $region14: #{image_transformer_numeric.1} parent=0 // pred_check
    _
  $region15: #{image_transformer_numeric.1} parent=0 // pred_check_branch
    %16 = sbr.rel (0) target = $region17
  $region16: #{image_transformer_numeric.1} parent=0 // pred_region
    _
  $region17: #{image_transformer_numeric.1} parent=0 // pred_fallthru
    _
  %v17 = vld [vmem:[%s0] sm:$0xff]
  %v18 = vld [vmem:[%s0 + $0x8] sm:$0xff]
  %v19 = vld [vmem:[%s1] sm:$0x1]
  %v21 = vlaneseq
  %v22 = vshrl.u32 %v21, 7
  %v23 = vsub.s32 0, %v22
  %v24 = vrot.slane %v19, %v23
  %v26 = vld [vmem:[%s2] sm:$0xff]
  %v27 = vld [vmem:[%s2 + $0x8] sm:$0xff]
  %29 = vset.pattern.permute.xlu0 0
  %30 = vperm.xlu0 %29, %v26
  %v31 = vpop.permute.xlu0 %30
  %34 = vset.pattern.permute.xlu0 0
  %35 = vperm.xlu0 %34, %v27
  %v36 = vpop.permute.xlu0 %35
  %v38 = vmul.f32 %v24, %v31
  %v39 = vmul.f32 %v24, %v36
  %40 = vrot.lane.b32.xlu0 %v17, 127
  %v41 = vpop.permute.xlu0 %40
  %42 = vrot.lane.b32.xlu0 %v18, 127
  %v43 = vpop.permute.xlu0 %42
  %v44 = vmul.f32 %v41, %v24
  %v45 = vmul.f32 %v43, %v24
  %v46 = vsub.f32 %v44, %v17
  %v47 = vsub.f32 %v45, %v18
  %v48 = vmax.f32 %v46, 0.0
  %v49 = vmax.f32 %v47, 0.0
  %v50 = vrot.slane %v48, 1
  %v51 = vrot.slane %v49, 1
  %v52 = vlaneseq
  %v53 = vshrl.u32 %v52, 7
  %vm54 = vcmp.lt.s32.totalorder %v53, 7
  %v55 = vsel %vm54, %v50, %v51
  %v56 = vsel %vm54, %v51, %v50
  %v57 = vmul.f32 %v55, %v31
  %v58 = vmul.f32 %v56, %v36
  %v59 = vsub.f32 %v57, %v48
  %v60 = vsub.f32 %v58, %v49
  %v61 = vmax.f32 %v59, 0.0
  %v62 = vmax.f32 %v60, 0.0
  %63 = vrot.lane.b32.xlu0 %v61, 127
  %v64 = vpop.permute.xlu0 %63
  %65 = vrot.lane.b32.xlu0 %v62, 127
  %v66 = vpop.permute.xlu0 %65
  %v67 = vmul.f32 %v64, %v24
  %v68 = vmul.f32 %v66, %v24
  %v69 = vrot.slane %v61, 1
  %v70 = vrot.slane %v62, 1
  %v71 = vsel %vm54, %v69, %v70
  %v72 = vsel %vm54, %v70, %v69
  %v73 = vmul.f32 %v71, %v31
  %v74 = vmul.f32 %v72, %v36
  %v75 = vsub.f32 %v67, %v73
  %v76 = vsub.f32 %v68, %v74
  %v77 = vmax.f32 %v75, 0.0
  %v78 = vmax.f32 %v76, 0.0
  %79 = vrot.lane.b32.xlu0 %v77, 127
  %v80 = vpop.permute.xlu0 %79
  %81 = vrot.lane.b32.xlu0 %v78, 127
  %v82 = vpop.permute.xlu0 %81
  %v83 = vrot.slane %v80, 1
  %v84 = vrot.slane %v82, 1
  %v85 = vsel %vm54, %v83, %v84
  %v86 = vsel %vm54, %v84, %v83
  %v87 = vmul.f32 %v85, %v38
  %v88 = vmul.f32 %v86, %v39
  %v89 = vsub.f32 %v77, %v87
  %v90 = vsub.f32 %v78, %v88
  %v91 = vmax.f32 %v89, 0.0
  %v92 = vmax.f32 %v90, 0.0
  %v93 = vrot.slane %v91, 1
  %v94 = vrot.slane %v92, 1
  %v95 = vsel %vm54, %v93, %v94
  %v96 = vsel %vm54, %v94, %v93
  %v97 = vmax.f32 %v91, %v95
  %v98 = vmax.f32 %v92, %v96
  %v99 = vrot.slane %v97, 2
  %v100 = vrot.slane %v98, 2
  %vm101 = vcmp.lt.s32.totalorder %v53, 6
  %v102 = vsel %vm101, %v99, %v100
  %v103 = vsel %vm101, %v100, %v99
  %v104 = vmax.f32 %v97, %v102
  %v105 = vmax.f32 %v98, %v103
  %v106 = vrot.slane %v104, 2
  %v107 = vrot.slane %v105, 2
  %v108 = vsel %vm101, %v106, %v107
  %v109 = vsel %vm101, %v107, %v106
  %v110 = vmax.f32 %v104, %v108
  %v111 = vmax.f32 %v105, %v109
  %v112 = vld [vmem:[%s3] sm:$0x3]
  %vm113 = vcmask 130048
  %v115 = vsel %vm113, %v112, 0
  %117 = vmatprep.subr.mxu0 0.0
  %118 = vmatpush1.msra.mxu0 0.0
  %119 = vmatprep.subr.mxu0 0.0
  %120 = vmatpush1.msra.mxu0 0.0
  %121 = vmatprep.subr.mxu0 0.0
  %122 = vmatpush1.msra.mxu0 0.0
  %123 = vmatprep.subr.mxu0 0.0
  %124 = vmatpush1.msra.mxu0 0.0
  %125 = vmatprep.subr.mxu0 0.0
  %126 = vmatpush1.msra.mxu0 0.0
  %127 = vmatprep.subr.mxu0 0.0
  %128 = vmatpush1.msra.mxu0 0.0
  %129 = vmatprep.subr.mxu0 0.0
  %130 = vmatpush1.msra.mxu0 0.0
  %131 = vmatprep.subr.mxu0 0.0
  %132 = vmatpush1.msra.mxu0 0.0
  %133 = vmatprep.subr.mxu0 0.0
  %134 = vmatpush1.msra.mxu0 0.0
  %135 = vmatprep.subr.mxu0 0.0
  %136 = vmatpush1.msra.mxu0 0.0
  %137 = vmatprep.subr.mxu0 0.0
  %138 = vmatpush1.msra.mxu0 0.0
  %139 = vmatprep.subr.mxu0 0.0
  %140 = vmatpush1.msra.mxu0 0.0
  %141 = vmatprep.subr.mxu0 0.0
  %142 = vmatpush1.msra.mxu0 0.0
  %143 = vmatprep.subr.mxu0 0.0
  %144 = vmatpush1.msra.mxu0 0.0
  %145 = vmatprep.subr.mxu0 0.0
  %v146 = vand.u32 %v111, 4294901760
  %147 = vmatpush1.msra.mxu0 %v146
  %148 = vmatprep.subr.mxu0 0.0
  %v149 = vand.u32 %v110, 4294901760
  %150 = vmatpush1.msra.mxu0 %v149
  %151 = vmatprep.subr.mxu0 0.0
  %152 = vmatpush2.msra.mxu0 0.0
  %153 = vmatprep.subr.mxu0 0.0
  %154 = vmatpush2.msra.mxu0 0.0
  %155 = vmatprep.subr.mxu0 0.0
  %156 = vmatpush2.msra.mxu0 0.0
  %157 = vmatprep.subr.mxu0 0.0
  %158 = vmatpush2.msra.mxu0 0.0
  %159 = vmatprep.subr.mxu0 0.0
  %160 = vmatpush2.msra.mxu0 0.0
  %161 = vmatprep.subr.mxu0 0.0
  %162 = vmatpush2.msra.mxu0 0.0
  %163 = vmatprep.subr.mxu0 0.0
  %164 = vmatpush2.msra.mxu0 0.0
  %165 = vmatprep.subr.mxu0 0.0
  %166 = vmatpush2.msra.mxu0 0.0
  %167 = vmatprep.subr.mxu0 0.0
  %168 = vmatpush2.msra.mxu0 0.0
  %169 = vmatprep.subr.mxu0 0.0
  %170 = vmatpush2.msra.mxu0 0.0
  %171 = vmatprep.subr.mxu0 0.0
  %172 = vmatpush2.msra.mxu0 0.0
  %173 = vmatprep.subr.mxu0 0.0
  %174 = vmatpush2.msra.mxu0 0.0
  %175 = vmatprep.subr.mxu0 0.0
  %176 = vmatpush2.msra.mxu0 0.0
  %177 = vmatprep.subr.mxu0 0.0
  %178 = vmatpush2.msra.mxu0 0.0
  %179 = vmatprep.subr.mxu0 0.0
  %180 = vmatpush2.msra.mxu0 0.0
  %181 = vmatprep.subr.mxu0 0.0
  %182 = vmatpush2.msra.mxu0 0.0
  %183 = vmatprep.mubr.f32.mxu0 0.0
  %v184 = vand.u32 %v115, 4294901760
  %v185 = vsub.f32 %v115, %v184
  %v186 = vand.u32 %v185, 4294901760
  %v187 = vsub.f32 %v185, %v186
  %v188 = vand.u32 %v187, 4294901760
  %189 = vmatmul.mubr.f32.gmra.mxu0 %v188
  %v190 = vpop.f32.mrf.mxu0
  %v191 = vadd.f32 0.0, %v190
  %v192 = vpop.f32.mrf.mxu0
  %193 = vdwg.mxu0
  %194 = vmatprep.subr.mxu0 0.0
  %195 = vmatpush1.msra.mxu0 0.0
  %196 = vmatprep.subr.mxu0 0.0
  %197 = vmatpush1.msra.mxu0 0.0
  %198 = vmatprep.subr.mxu0 0.0
  %199 = vmatpush1.msra.mxu0 0.0
  %200 = vmatprep.subr.mxu0 0.0
  %201 = vmatpush1.msra.mxu0 0.0
  %202 = vmatprep.subr.mxu0 0.0
  %203 = vmatpush1.msra.mxu0 0.0
  %204 = vmatprep.subr.mxu0 0.0
  %205 = vmatpush1.msra.mxu0 0.0
  %206 = vmatprep.subr.mxu0 0.0
  %207 = vmatpush1.msra.mxu0 0.0
  %208 = vmatprep.subr.mxu0 0.0
  %209 = vmatpush1.msra.mxu0 0.0
  %210 = vmatprep.subr.mxu0 0.0
  %211 = vmatpush1.msra.mxu0 0.0
  %212 = vmatprep.subr.mxu0 0.0
  %213 = vmatpush1.msra.mxu0 0.0
  %214 = vmatprep.subr.mxu0 0.0
  %215 = vmatpush1.msra.mxu0 0.0
  %216 = vmatprep.subr.mxu0 0.0
  %217 = vmatpush1.msra.mxu0 0.0
  %218 = vmatprep.subr.mxu0 0.0
  %219 = vmatpush1.msra.mxu0 0.0
  %220 = vmatprep.subr.mxu0 0.0
  %221 = vmatpush1.msra.mxu0 0.0
  %222 = vmatprep.subr.mxu0 0.0
  %v223 = vand.u32 %v111, 4294901760
  %v224 = vsub.f32 %v111, %v223
  %v225 = vand.u32 %v224, 4294901760
  %v226 = vsub.f32 %v224, %v225
  %v227 = vand.u32 %v226, 4294901760
  %228 = vmatpush1.msra.mxu0 %v227
  %229 = vmatprep.subr.mxu0 0.0
  %v230 = vand.u32 %v110, 4294901760
  %v231 = vsub.f32 %v110, %v230
  %v232 = vand.u32 %v231, 4294901760
  %v233 = vsub.f32 %v231, %v232
  %v234 = vand.u32 %v233, 4294901760
  %235 = vmatpush1.msra.mxu0 %v234
  %236 = vmatprep.subr.mxu0 0.0
  %237 = vmatpush2.msra.mxu0 0.0
  %238 = vmatprep.subr.mxu0 0.0
  %239 = vmatpush2.msra.mxu0 0.0
  %240 = vmatprep.subr.mxu0 0.0
  %241 = vmatpush2.msra.mxu0 0.0
  %242 = vmatprep.subr.mxu0 0.0
  %243 = vmatpush2.msra.mxu0 0.0
  %244 = vmatprep.subr.mxu0 0.0
  %245 = vmatpush2.msra.mxu0 0.0
  %246 = vmatprep.subr.mxu0 0.0
  %247 = vmatpush2.msra.mxu0 0.0
  %248 = vmatprep.subr.mxu0 0.0
  %249 = vmatpush2.msra.mxu0 0.0
  %250 = vmatprep.subr.mxu0 0.0
  %251 = vmatpush2.msra.mxu0 0.0
  %252 = vmatprep.subr.mxu0 0.0
  %253 = vmatpush2.msra.mxu0 0.0
  %254 = vmatprep.subr.mxu0 0.0
  %255 = vmatpush2.msra.mxu0 0.0
  %256 = vmatprep.subr.mxu0 0.0
  %257 = vmatpush2.msra.mxu0 0.0
  %258 = vmatprep.subr.mxu0 0.0
  %259 = vmatpush2.msra.mxu0 0.0
  %260 = vmatprep.subr.mxu0 0.0
  %261 = vmatpush2.msra.mxu0 0.0
  %262 = vmatprep.subr.mxu0 0.0
  %263 = vmatpush2.msra.mxu0 0.0
  %264 = vmatprep.subr.mxu0 0.0
  %265 = vmatpush2.msra.mxu0 0.0
  %266 = vmatprep.subr.mxu0 0.0
  %267 = vmatpush2.msra.mxu0 0.0
  %268 = vmatprep.mubr.f32.mxu0 0.0
  %v269 = vand.u32 %v115, 4294901760
  %270 = vmatmul.mubr.f32.gmra.mxu0 %v269
  %v271 = vpop.f32.mrf.mxu0
  %v272 = vadd.f32 %v191, %v271
  %v273 = vpop.f32.mrf.mxu0
  %274 = vdwg.mxu0
  %275 = vmatprep.subr.mxu0 0.0
  %276 = vmatpush1.msra.mxu0 0.0
  %277 = vmatprep.subr.mxu0 0.0
  %278 = vmatpush1.msra.mxu0 0.0
  %279 = vmatprep.subr.mxu0 0.0
  %280 = vmatpush1.msra.mxu0 0.0
  %281 = vmatprep.subr.mxu0 0.0
  %282 = vmatpush1.msra.mxu0 0.0
  %283 = vmatprep.subr.mxu0 0.0
  %284 = vmatpush1.msra.mxu0 0.0
  %285 = vmatprep.subr.mxu0 0.0
  %286 = vmatpush1.msra.mxu0 0.0
  %287 = vmatprep.subr.mxu0 0.0
  %288 = vmatpush1.msra.mxu0 0.0
  %289 = vmatprep.subr.mxu0 0.0
  %290 = vmatpush1.msra.mxu0 0.0
  %291 = vmatprep.subr.mxu0 0.0
  %292 = vmatpush1.msra.mxu0 0.0
  %293 = vmatprep.subr.mxu0 0.0
  %294 = vmatpush1.msra.mxu0 0.0
  %295 = vmatprep.subr.mxu0 0.0
  %296 = vmatpush1.msra.mxu0 0.0
  %297 = vmatprep.subr.mxu0 0.0
  %298 = vmatpush1.msra.mxu0 0.0
  %299 = vmatprep.subr.mxu0 0.0
  %300 = vmatpush1.msra.mxu0 0.0
  %301 = vmatprep.subr.mxu0 0.0
  %302 = vmatpush1.msra.mxu0 0.0
  %303 = vmatprep.subr.mxu0 0.0
  %v304 = vand.u32 %v111, 4294901760
  %v305 = vsub.f32 %v111, %v304
  %306 = vmatpush1.msra.mxu0 %v305
  %307 = vmatprep.subr.mxu0 0.0
  %v308 = vand.u32 %v110, 4294901760
  %v309 = vsub.f32 %v110, %v308
  %310 = vmatpush1.msra.mxu0 %v309
  %311 = vmatprep.subr.mxu0 0.0
  %312 = vmatpush2.msra.mxu0 0.0
  %313 = vmatprep.subr.mxu0 0.0
  %314 = vmatpush2.msra.mxu0 0.0
  %315 = vmatprep.subr.mxu0 0.0
  %316 = vmatpush2.msra.mxu0 0.0
  %317 = vmatprep.subr.mxu0 0.0
  %318 = vmatpush2.msra.mxu0 0.0
  %319 = vmatprep.subr.mxu0 0.0
  %320 = vmatpush2.msra.mxu0 0.0
  %321 = vmatprep.subr.mxu0 0.0
  %322 = vmatpush2.msra.mxu0 0.0
  %323 = vmatprep.subr.mxu0 0.0
  %324 = vmatpush2.msra.mxu0 0.0
  %325 = vmatprep.subr.mxu0 0.0
  %326 = vmatpush2.msra.mxu0 0.0
  %327 = vmatprep.subr.mxu0 0.0
  %328 = vmatpush2.msra.mxu0 0.0
  %329 = vmatprep.subr.mxu0 0.0
  %330 = vmatpush2.msra.mxu0 0.0
  %331 = vmatprep.subr.mxu0 0.0
  %332 = vmatpush2.msra.mxu0 0.0
  %333 = vmatprep.subr.mxu0 0.0
  %334 = vmatpush2.msra.mxu0 0.0
  %335 = vmatprep.subr.mxu0 0.0
  %336 = vmatpush2.msra.mxu0 0.0
  %337 = vmatprep.subr.mxu0 0.0
  %338 = vmatpush2.msra.mxu0 0.0
  %339 = vmatprep.subr.mxu0 0.0
  %340 = vmatpush2.msra.mxu0 0.0
  %341 = vmatprep.subr.mxu0 0.0
  %342 = vmatpush2.msra.mxu0 0.0
  %343 = vmatprep.mubr.f32.mxu0 0.0
  %v344 = vand.u32 %v115, 4294901760
  %v345 = vsub.f32 %v115, %v344
  %346 = vmatmul.mubr.f32.gmra.mxu0 %v345
  %v347 = vpop.f32.mrf.mxu0
  %v348 = vadd.f32 %v272, %v347
  %v349 = vpop.f32.mrf.mxu0
  %350 = vdwg.mxu0
  %351 = vmatprep.subr.mxu0 0.0
  %352 = vmatpush1.msra.mxu0 0.0
  %353 = vmatprep.subr.mxu0 0.0
  %354 = vmatpush1.msra.mxu0 0.0
  %355 = vmatprep.subr.mxu0 0.0
  %356 = vmatpush1.msra.mxu0 0.0
  %357 = vmatprep.subr.mxu0 0.0
  %358 = vmatpush1.msra.mxu0 0.0
  %359 = vmatprep.subr.mxu0 0.0
  %360 = vmatpush1.msra.mxu0 0.0
  %361 = vmatprep.subr.mxu0 0.0
  %362 = vmatpush1.msra.mxu0 0.0
  %363 = vmatprep.subr.mxu0 0.0
  %364 = vmatpush1.msra.mxu0 0.0
  %365 = vmatprep.subr.mxu0 0.0
  %366 = vmatpush1.msra.mxu0 0.0
  %367 = vmatprep.subr.mxu0 0.0
  %368 = vmatpush1.msra.mxu0 0.0
  %369 = vmatprep.subr.mxu0 0.0
  %370 = vmatpush1.msra.mxu0 0.0
  %371 = vmatprep.subr.mxu0 0.0
  %372 = vmatpush1.msra.mxu0 0.0
  %373 = vmatprep.subr.mxu0 0.0
  %374 = vmatpush1.msra.mxu0 0.0
  %375 = vmatprep.subr.mxu0 0.0
  %376 = vmatpush1.msra.mxu0 0.0
  %377 = vmatprep.subr.mxu0 0.0
  %378 = vmatpush1.msra.mxu0 0.0
  %379 = vmatprep.subr.mxu0 0.0
  %v380 = vand.u32 %v111, 4294901760
  %381 = vmatpush1.msra.mxu0 %v380
  %382 = vmatprep.subr.mxu0 0.0
  %v383 = vand.u32 %v110, 4294901760
  %384 = vmatpush1.msra.mxu0 %v383
  %385 = vmatprep.subr.mxu0 0.0
  %386 = vmatpush2.msra.mxu0 0.0
  %387 = vmatprep.subr.mxu0 0.0
  %388 = vmatpush2.msra.mxu0 0.0
  %389 = vmatprep.subr.mxu0 0.0
  %390 = vmatpush2.msra.mxu0 0.0
  %391 = vmatprep.subr.mxu0 0.0
  %392 = vmatpush2.msra.mxu0 0.0
  %393 = vmatprep.subr.mxu0 0.0
  %394 = vmatpush2.msra.mxu0 0.0
  %395 = vmatprep.subr.mxu0 0.0
  %396 = vmatpush2.msra.mxu0 0.0
  %397 = vmatprep.subr.mxu0 0.0
  %398 = vmatpush2.msra.mxu0 0.0
  %399 = vmatprep.subr.mxu0 0.0
  %400 = vmatpush2.msra.mxu0 0.0
  %401 = vmatprep.subr.mxu0 0.0
  %402 = vmatpush2.msra.mxu0 0.0
  %403 = vmatprep.subr.mxu0 0.0
  %404 = vmatpush2.msra.mxu0 0.0
  %405 = vmatprep.subr.mxu0 0.0
  %406 = vmatpush2.msra.mxu0 0.0
  %407 = vmatprep.subr.mxu0 0.0
  %408 = vmatpush2.msra.mxu0 0.0
  %409 = vmatprep.subr.mxu0 0.0
  %410 = vmatpush2.msra.mxu0 0.0
  %411 = vmatprep.subr.mxu0 0.0
  %412 = vmatpush2.msra.mxu0 0.0
  %413 = vmatprep.subr.mxu0 0.0
  %414 = vmatpush2.msra.mxu0 0.0
  %415 = vmatprep.subr.mxu0 0.0
  %416 = vmatpush2.msra.mxu0 0.0
  %417 = vmatprep.mubr.f32.mxu0 0.0
  %v418 = vand.u32 %v115, 4294901760
  %v419 = vsub.f32 %v115, %v418
  %v420 = vand.u32 %v419, 4294901760
  %421 = vmatmul.mubr.f32.gmra.mxu0 %v420
  %v422 = vpop.f32.mrf.mxu0
  %v423 = vadd.f32 %v348, %v422
  %v424 = vpop.f32.mrf.mxu0
  %425 = vdwg.mxu0
  %426 = vmatprep.subr.mxu0 0.0
  %427 = vmatpush1.msra.mxu0 0.0
  %428 = vmatprep.subr.mxu0 0.0
  %429 = vmatpush1.msra.mxu0 0.0
  %430 = vmatprep.subr.mxu0 0.0
  %431 = vmatpush1.msra.mxu0 0.0
  %432 = vmatprep.subr.mxu0 0.0
  %433 = vmatpush1.msra.mxu0 0.0
  %434 = vmatprep.subr.mxu0 0.0
  %435 = vmatpush1.msra.mxu0 0.0
  %436 = vmatprep.subr.mxu0 0.0
  %437 = vmatpush1.msra.mxu0 0.0
  %438 = vmatprep.subr.mxu0 0.0
  %439 = vmatpush1.msra.mxu0 0.0
  %440 = vmatprep.subr.mxu0 0.0
  %441 = vmatpush1.msra.mxu0 0.0
  %442 = vmatprep.subr.mxu0 0.0
  %443 = vmatpush1.msra.mxu0 0.0
  %444 = vmatprep.subr.mxu0 0.0
  %445 = vmatpush1.msra.mxu0 0.0
  %446 = vmatprep.subr.mxu0 0.0
  %447 = vmatpush1.msra.mxu0 0.0
  %448 = vmatprep.subr.mxu0 0.0
  %449 = vmatpush1.msra.mxu0 0.0
  %450 = vmatprep.subr.mxu0 0.0
  %451 = vmatpush1.msra.mxu0 0.0
  %452 = vmatprep.subr.mxu0 0.0
  %453 = vmatpush1.msra.mxu0 0.0
  %454 = vmatprep.subr.mxu0 0.0
  %v455 = vand.u32 %v111, 4294901760
  %v456 = vsub.f32 %v111, %v455
  %v457 = vand.u32 %v456, 4294901760
  %458 = vmatpush1.msra.mxu0 %v457
  %459 = vmatprep.subr.mxu0 0.0
  %v460 = vand.u32 %v110, 4294901760
  %v461 = vsub.f32 %v110, %v460
  %v462 = vand.u32 %v461, 4294901760
  %463 = vmatpush1.msra.mxu0 %v462
  %464 = vmatprep.subr.mxu0 0.0
  %465 = vmatpush2.msra.mxu0 0.0
  %466 = vmatprep.subr.mxu0 0.0
  %467 = vmatpush2.msra.mxu0 0.0
  %468 = vmatprep.subr.mxu0 0.0
  %469 = vmatpush2.msra.mxu0 0.0
  %470 = vmatprep.subr.mxu0 0.0
  %471 = vmatpush2.msra.mxu0 0.0
  %472 = vmatprep.subr.mxu0 0.0
  %473 = vmatpush2.msra.mxu0 0.0
  %474 = vmatprep.subr.mxu0 0.0
  %475 = vmatpush2.msra.mxu0 0.0
  %476 = vmatprep.subr.mxu0 0.0
  %477 = vmatpush2.msra.mxu0 0.0
  %478 = vmatprep.subr.mxu0 0.0
  %479 = vmatpush2.msra.mxu0 0.0
  %480 = vmatprep.subr.mxu0 0.0
  %481 = vmatpush2.msra.mxu0 0.0
  %482 = vmatprep.subr.mxu0 0.0
  %483 = vmatpush2.msra.mxu0 0.0
  %484 = vmatprep.subr.mxu0 0.0
  %485 = vmatpush2.msra.mxu0 0.0
  %486 = vmatprep.subr.mxu0 0.0
  %487 = vmatpush2.msra.mxu0 0.0
  %488 = vmatprep.subr.mxu0 0.0
  %489 = vmatpush2.msra.mxu0 0.0
  %490 = vmatprep.subr.mxu0 0.0
  %491 = vmatpush2.msra.mxu0 0.0
  %492 = vmatprep.subr.mxu0 0.0
  %493 = vmatpush2.msra.mxu0 0.0
  %494 = vmatprep.subr.mxu0 0.0
  %495 = vmatpush2.msra.mxu0 0.0
  %496 = vmatprep.mubr.f32.mxu0 0.0
  %v497 = vand.u32 %v115, 4294901760
  %498 = vmatmul.mubr.f32.gmra.mxu0 %v497
  %v499 = vpop.f32.mrf.mxu0
  %v500 = vadd.f32 %v423, %v499
  %v501 = vpop.f32.mrf.mxu0
  %502 = vdwg.mxu0
  %503 = vmatprep.subr.mxu0 0.0
  %504 = vmatpush1.msra.mxu0 0.0
  %505 = vmatprep.subr.mxu0 0.0
  %506 = vmatpush1.msra.mxu0 0.0
  %507 = vmatprep.subr.mxu0 0.0
  %508 = vmatpush1.msra.mxu0 0.0
  %509 = vmatprep.subr.mxu0 0.0
  %510 = vmatpush1.msra.mxu0 0.0
  %511 = vmatprep.subr.mxu0 0.0
  %512 = vmatpush1.msra.mxu0 0.0
  %513 = vmatprep.subr.mxu0 0.0
  %514 = vmatpush1.msra.mxu0 0.0
  %515 = vmatprep.subr.mxu0 0.0
  %516 = vmatpush1.msra.mxu0 0.0
  %517 = vmatprep.subr.mxu0 0.0
  %518 = vmatpush1.msra.mxu0 0.0
  %519 = vmatprep.subr.mxu0 0.0
  %520 = vmatpush1.msra.mxu0 0.0
  %521 = vmatprep.subr.mxu0 0.0
  %522 = vmatpush1.msra.mxu0 0.0
  %523 = vmatprep.subr.mxu0 0.0
  %524 = vmatpush1.msra.mxu0 0.0
  %525 = vmatprep.subr.mxu0 0.0
  %526 = vmatpush1.msra.mxu0 0.0
  %527 = vmatprep.subr.mxu0 0.0
  %528 = vmatpush1.msra.mxu0 0.0
  %529 = vmatprep.subr.mxu0 0.0
  %530 = vmatpush1.msra.mxu0 0.0
  %531 = vmatprep.subr.mxu0 0.0
  %v532 = vand.u32 %v111, 4294901760
  %533 = vmatpush1.msra.mxu0 %v532
  %534 = vmatprep.subr.mxu0 0.0
  %v535 = vand.u32 %v110, 4294901760
  %536 = vmatpush1.msra.mxu0 %v535
  %537 = vmatprep.subr.mxu0 0.0
  %538 = vmatpush2.msra.mxu0 0.0
  %539 = vmatprep.subr.mxu0 0.0
  %540 = vmatpush2.msra.mxu0 0.0
  %541 = vmatprep.subr.mxu0 0.0
  %542 = vmatpush2.msra.mxu0 0.0
  %543 = vmatprep.subr.mxu0 0.0
  %544 = vmatpush2.msra.mxu0 0.0
  %545 = vmatprep.subr.mxu0 0.0
  %546 = vmatpush2.msra.mxu0 0.0
  %547 = vmatprep.subr.mxu0 0.0
  %548 = vmatpush2.msra.mxu0 0.0
  %549 = vmatprep.subr.mxu0 0.0
  %550 = vmatpush2.msra.mxu0 0.0
  %551 = vmatprep.subr.mxu0 0.0
  %552 = vmatpush2.msra.mxu0 0.0
  %553 = vmatprep.subr.mxu0 0.0
  %554 = vmatpush2.msra.mxu0 0.0
  %555 = vmatprep.subr.mxu0 0.0
  %556 = vmatpush2.msra.mxu0 0.0
  %557 = vmatprep.subr.mxu0 0.0
  %558 = vmatpush2.msra.mxu0 0.0
  %559 = vmatprep.subr.mxu0 0.0
  %560 = vmatpush2.msra.mxu0 0.0
  %561 = vmatprep.subr.mxu0 0.0
  %562 = vmatpush2.msra.mxu0 0.0
  %563 = vmatprep.subr.mxu0 0.0
  %564 = vmatpush2.msra.mxu0 0.0
  %565 = vmatprep.subr.mxu0 0.0
  %566 = vmatpush2.msra.mxu0 0.0
  %567 = vmatprep.subr.mxu0 0.0
  %568 = vmatpush2.msra.mxu0 0.0
  %569 = vmatprep.mubr.f32.mxu0 0.0
  %v570 = vand.u32 %v115, 4294901760
  %571 = vmatmul.mubr.f32.gmra.mxu0 %v570
  %v572 = vpop.f32.mrf.mxu0
  %v573 = vadd.f32 %v500, %v572
  %v574 = vpop.f32.mrf.mxu0
  %575 = vdwg.mxu0
  %576 = vrot.lane.b32.xlu0 %v573, 127
  %v577 = vpop.permute.xlu0 %576
  %v578 = vmax.f32 %v573, %v577
  %579 = vrot.lane.b32.xlu0 %v578, 126
  %v580 = vpop.permute.xlu0 %579
  %v581 = vmax.f32 %v578, %v580
  %582 = vrot.lane.b32.xlu0 %v581, 126
  %v583 = vpop.permute.xlu0 %582
  %v584 = vmax.f32 %v581, %v583
  %585 = vst [vmem:[%s4] sm:$0x3] %v584
  // Predicated region
  $region18: #{image_transformer_numeric.1} parent=0 // pred_check
    _
  $region19: #{image_transformer_numeric.1} parent=0 // pred_check_branch
    %587 = sbr.rel (0) target = $region21
  $region20: #{image_transformer_numeric.1} parent=0 // pred_region
    _
  $region21: #{image_transformer_numeric.1} parent=0 // pred_fallthru
    _
  // Predicated region
  $region22: #{image_transformer_numeric.1} parent=0 // pred_check
    _
  $region23: #{image_transformer_numeric.1} parent=0 // pred_check_branch
    %589 = sbr.rel (0) target = $region25
  $region24: #{image_transformer_numeric.1} parent=0 // pred_region
    _
  $region25: #{image_transformer_numeric.1} parent=0 // pred_fallthru
    _

</llo_original>
